<compile_context>
chip_gen: v6e
topology: v6e:2x2x1
jax: 0.10.0
libtpu: 0.0.40
codegen_flags: <defaults>
</compile_context>

<pallas_src>
import functools

import jax
import jax.numpy as jnp
from jax.experimental import pallas as pl
from jax.experimental.pallas import tpu as pltpu

LN_EPS = 1e-5  # torch.nn.LayerNorm default


def _round_up(x, m):
    return ((x + m - 1) // m) * m


# ---------------------------------------------------------------------------
# Fused whole-network kernel (feature-major: batch on the lane axis)
# ---------------------------------------------------------------------------
def _make_fcdp_kernel(num_hidden, cast_lhs_bf16):
    """Ref layout: [x, (w, bgb) * num_hidden, w_out, bo_amax, out].

    x       : (F_in, BT)   activations, batch on lanes
    w       : (H, F_prev)  torch (out, in) order
    bgb     : (H, 3)       columns = [bias, ln_gamma, ln_beta]
    w_out   : (O, H_last)
    bo_amax : (O, 2)       columns = [out_bias, action_maxs]
    out     : (O, BT)
    """

    def kernel(*refs):
        x = refs[0][...]                                    # (F_in, BT) f32
        idx = 1
        for _ in range(num_hidden):
            w = refs[idx][...]                              # (H, F_prev)
            bgb = refs[idx + 1][...]                        # (H, 3)
            idx += 2
            rhs = x.astype(jnp.bfloat16) if cast_lhs_bf16 else x
            y = jnp.dot(w, rhs, preferred_element_type=jnp.float32)   # (H, BT)
            y = y + bgb[:, 0:1]                             # + bias (bcast over batch)
            # LayerNorm over the feature (sublane) axis, per batch column.
            mean = jnp.mean(y, axis=0, keepdims=True)                  # (1, BT)
            var = jnp.mean(y * y, axis=0, keepdims=True) - mean * mean
            var = jnp.maximum(var, 0.0)     # clamp: single-pass var can go < 0
            y = (y - mean) * jax.lax.rsqrt(var + LN_EPS)
            y = y * bgb[:, 1:2] + bgb[:, 2:3]               # * gamma + beta
            x = jnp.maximum(y, 0.0)                         # ReLU

        w_out = refs[idx][...]                              # (O, H_last)
        bo_amax = refs[idx + 1][...]                        # (O, 2)
        o_ref = refs[idx + 2]
        rhs = x.astype(jnp.bfloat16) if cast_lhs_bf16 else x
        y = jnp.dot(w_out, rhs, preferred_element_type=jnp.float32)
        y = y + bo_amax[:, 0:1]
        o_ref[...] = jnp.tanh(y) * bo_amax[:, 1:2]          # tanh(.) * action_maxs

    return kernel


def _param_spec(shape, single_buffer):
    """Full-array, grid-invariant, VMEM-resident parameter block."""
    kwargs = {}
    if single_buffer:
        # Constant index_map => the 2nd pipeline buffer is never used.
        kwargs["pipeline_mode"] = pl.Buffered(1)
    return pl.BlockSpec(shape, lambda i: (0,) * len(shape),
                        memory_space=pltpu.MemorySpace.VMEM, **kwargs)


# ---------------------------------------------------------------------------
# Wrapper: single pallas_call for the whole forward pass
# ---------------------------------------------------------------------------
@functools.partial(
    jax.jit,
    static_argnames=("use_bf16_matmul", "max_batch_tile", "single_buffer_params"))
def fcdp_forward(states, params, action_maxs, *, use_bf16_matmul=False,
                 max_batch_tile=1024, single_buffer_params=False):
    x = jnp.asarray(states, jnp.float32)
    B, f_in = x.shape
    hidden = params["hidden"]
    w_out, b_out = params["out"]
    n_out = w_out.shape[0]
    num_hidden = len(hidden)

    # bf16 MXU operands only pay off when contraction dims are large; at
    # K=16/32 the MXU is idle anyway and the casts cost VPU work (v5e has no
    # bf16 VPU path at all).
    contract_dims = [f_in] + [w.shape[0] for (w, _, _, _) in hidden]
    bf16 = bool(use_bf16_matmul) and min(contract_dims) >= 256

    # ---- batch tiling: batch lives on the 128-lane axis ----
    if B <= 256:
        bt = B                       # single full-extent block
        n_tiles = 1
    else:
        mbt = max(128, (max_batch_tile // 128) * 128)
        # aim for >= 2 grid steps so v7x's two TensorCores both get work;
        # non-final tiles must be a multiple of 128 lanes.
        bt = min(mbt, _round_up(-(-B // 2), 128))
        n_tiles = pl.cdiv(B, bt)

    # ---- pack operands (feature-major, weights kept in torch (out,in) order) ----
    xt = x.T                                                # (F_in, B)
    inputs = [xt]
    in_specs = [pl.BlockSpec((f_in, bt), lambda i: (0, i),
                             memory_space=pltpu.MemorySpace.VMEM)]
    for (w, b, gamma, beta) in hidden:
        wk = w.astype(jnp.bfloat16) if bf16 else w.astype(jnp.float32)
        bgb = jnp.stack([b, gamma, beta], axis=1).astype(jnp.float32)   # (H, 3)
        inputs += [wk, bgb]
        in_specs += [_param_spec(wk.shape, single_buffer_params),
                     _param_spec(bgb.shape, single_buffer_params)]
    amax = jnp.asarray(action_maxs, jnp.float32).reshape(-1)            # (O,)
    wo = w_out.astype(jnp.bfloat16) if bf16 else w_out.astype(jnp.float32)
    bo_amax = jnp.stack([b_out.astype(jnp.float32), amax], axis=1)      # (O, 2)
    inputs += [wo, bo_amax]
    in_specs += [_param_spec(wo.shape, single_buffer_params),
                 _param_spec(bo_amax.shape, single_buffer_params)]

    # ---- explicit VMEM budget: double-buffered tiles + params + temporaries ----
    param_bytes = sum(int(a.size) * a.dtype.itemsize for a in inputs[1:])
    io_bytes = (f_in + n_out) * bt * 4
    act_bytes = max(contract_dims + [n_out]) * bt * 4 * 6
    vmem_limit = int(1.5 * (2 * (param_bytes + io_bytes) + act_bytes)) + (2 << 20)
    vmem_limit = max(16 << 20, min(vmem_limit, 64 << 20))   # safe on v5e..v7x

    out = pl.pallas_call(
        _make_fcdp_kernel(num_hidden, bf16),
        grid=(n_tiles,),
        in_specs=in_specs,
        out_specs=pl.BlockSpec((n_out, bt), lambda i: (0, i),
                               memory_space=pltpu.MemorySpace.VMEM),
        out_shape=jax.ShapeDtypeStruct((n_out, B), jnp.float32),
        compiler_params=pltpu.CompilerParams(
            dimension_semantics=("parallel",),
            vmem_limit_bytes=vmem_limit),
    )(*inputs)
    return out.T                                            # (B, O)


# ---------------------------------------------------------------------------
# Parameter construction (torch nn.Linear default init, (out,in) weight order)
# ---------------------------------------------------------------------------
def init_fcdp_params(key, input_size, output_size, hidden_layers):
    params = {"hidden": [], "out": None}
    prev = input_size
    for h in hidden_layers:
        key, kw, kb = jax.random.split(key, 3)
        bound = 1.0 / (prev ** 0.5)
        w = jax.random.uniform(kw, (h, prev), jnp.float32, -bound, bound)
        b = jax.random.uniform(kb, (h,), jnp.float32, -bound, bound)
        gamma = jnp.ones((h,), jnp.float32)    # LayerNorm weight init
        beta = jnp.zeros((h,), jnp.float32)    # LayerNorm bias init
        params["hidden"].append((w, b, gamma, beta))
        prev = h
    key, kw, kb = jax.random.split(key, 3)
    bound = 1.0 / (prev ** 0.5)
    w_out = jax.random.uniform(kw, (output_size, prev), jnp.float32, -bound, bound)
    b_out = jax.random.uniform(kb, (output_size,), jnp.float32, -bound, bound)
    params["out"] = (w_out, b_out)
    return params


# ---------------------------------------------------------------------------
# Reference (pure JAX) for sanity checks
# ---------------------------------------------------------------------------
def fcdp_forward_ref(states, params, action_maxs):
    x = jnp.asarray(states, jnp.float32)
    for (w, b, gamma, beta) in params["hidden"]:
        y = x @ w.T + b
        mean = jnp.mean(y, axis=-1, keepdims=True)
        var = jnp.mean((y - mean) ** 2, axis=-1, keepdims=True)
        y = (y - mean) / jnp.sqrt(var + LN_EPS) * gamma + beta
        x = jnp.maximum(y, 0.0)
    w_out, b_out = params["out"]
    amax = jnp.asarray(action_maxs, jnp.float32).reshape(-1)
    return jnp.tanh(x @ w_out.T + b_out) * amax


if __name__ == "__main__":
    key = jax.random.PRNGKey(0)

    # ---- test 1: module-sized toy shapes (single batch tile) ----
    batch, input_size, hidden_layers, output_size = 8, 16, (32, 32), 4
    action_maxs = jnp.array([1.0, 2.0, 0.5, 1.5], dtype=jnp.float32)
    key, k_params, k_states = jax.random.split(key, 3)
    params = init_fcdp_params(k_params, input_size, output_size, hidden_layers)
    states = jax.random.normal(k_states, (batch, input_size), jnp.float32)

    out = jax.block_until_ready(fcdp_forward(states, params, action_maxs))
    ref = fcdp_forward_ref(states, params, action_maxs)
    assert out.shape == (batch, output_size)
    assert jnp.allclose(out, ref, atol=2e-5, rtol=2e-5), "mismatch vs reference (small)"

    # ---- test 2: multi-tile batch grid with a ragged last block ----
    batch2, input2, hidden2, output2 = 384, 32, (64, 64), 6
    action_maxs2 = jnp.linspace(0.5, 2.0, output2, dtype=jnp.float32)
    key, k_params2, k_states2 = jax.random.split(key, 3)
    params2 = init_fcdp_params(k_params2, input2, output2, hidden2)
    states2 = jax.random.normal(k_states2, (batch2, input2), jnp.float32)

    out2 = jax.block_until_ready(
        fcdp_forward(states2, params2, action_maxs2, max_batch_tile=256))
    ref2 = fcdp_forward_ref(states2, params2, action_maxs2)
    assert out2.shape == (batch2, output2)
    assert jnp.allclose(out2, ref2, atol=1e-4, rtol=1e-4), "mismatch vs reference (tiled)"

    # TODO(synk): optimizer / optimize() / reset() training utilities are out of
    # scope for a forward-pass kernel and are not implemented here.
    print("KERNEL_OK")
</pallas_src>

<mosaic_0001>
module attributes {stable_mosaic.version = 11 : i64} {
  func.func @kernel(%arg0: i32, %arg1: memref<16x8xf32, #tpu.memory_space<vmem>>, %arg2: memref<32x16xf32, #tpu.memory_space<vmem>>, %arg3: memref<32x3xf32, #tpu.memory_space<vmem>>, %arg4: memref<32x32xf32, #tpu.memory_space<vmem>>, %arg5: memref<32x3xf32, #tpu.memory_space<vmem>>, %arg6: memref<4x32xf32, #tpu.memory_space<vmem>>, %arg7: memref<4x2xf32, #tpu.memory_space<vmem>>, %arg8: memref<4x8xf32, #tpu.memory_space<vmem>>) attributes {dimension_semantics = [#tpu.dimension_semantics<parallel>], iteration_bounds = array<i64: 1>, scalar_prefetch = 0 : i64, scratch_operands = 0 : i64, tpu.core_type = #tpu.core_type<tc>, window_params = [{transform_indices = @transform_0, window_bounds = array<i64: 16, 8>}, {pipeline_mode = #tpu.pipeline_mode<synchronous>, transform_indices = @transform_1, window_bounds = array<i64: 32, 16>}, {pipeline_mode = #tpu.pipeline_mode<synchronous>, transform_indices = @transform_2, window_bounds = array<i64: 32, 3>}, {pipeline_mode = #tpu.pipeline_mode<synchronous>, transform_indices = @transform_3, window_bounds = array<i64: 32, 32>}, {pipeline_mode = #tpu.pipeline_mode<synchronous>, transform_indices = @transform_4, window_bounds = array<i64: 32, 3>}, {pipeline_mode = #tpu.pipeline_mode<synchronous>, transform_indices = @transform_5, window_bounds = array<i64: 4, 32>}, {pipeline_mode = #tpu.pipeline_mode<synchronous>, transform_indices = @transform_6, window_bounds = array<i64: 4, 2>}, {transform_indices = @transform_7, window_bounds = array<i64: 4, 8>}]} {
    %c0 = arith.constant 0 : index
    %c0_0 = arith.constant 0 : index
    %0 = vector.load %arg1[%c0, %c0_0] : memref<16x8xf32, #tpu.memory_space<vmem>>, vector<16x8xf32>
    %c0_1 = arith.constant 0 : index
    %c0_2 = arith.constant 0 : index
    %1 = vector.load %arg2[%c0_1, %c0_2] : memref<32x16xf32, #tpu.memory_space<vmem>>, vector<32x16xf32>
    %c0_3 = arith.constant 0 : index
    %c0_4 = arith.constant 0 : index
    %2 = vector.load %arg3[%c0_3, %c0_4] : memref<32x3xf32, #tpu.memory_space<vmem>>, vector<32x3xf32>
    %cst = arith.constant dense<0.000000e+00> : vector<32x8xf32>
    %3 = tpu.matmul %1, %0, %cst {dimension_numbers = #tpu.dot_dimension_numbers<[1], [0], [0], [1], [0, 0, 1, 1], [], []>} : vector<32x16xf32>, vector<16x8xf32>, vector<32x8xf32> -> vector<32x8xf32>
    %4 = vector.extract_strided_slice %2 {offsets = [0, 0], sizes = [32, 1], strides = [1, 1]} : vector<32x3xf32> to vector<32x1xf32>
    %5 = vector.broadcast %4 : vector<32x1xf32> to vector<32x8xf32>
    %6 = arith.addf %3, %5 : vector<32x8xf32>
    %cst_5 = arith.constant dense<0.000000e+00> : vector<8xf32>
    %7 = vector.multi_reduction <add>, %6, %cst_5 [0] : vector<32x8xf32> to vector<8xf32>
    %8 = vector.shape_cast %7 : vector<8xf32> to vector<1x8xf32>
    %cst_6 = arith.constant 3.200000e+01 : f32
    %9 = vector.broadcast %cst_6 : f32 to vector<1x8xf32>
    %10 = arith.divf %8, %9 : vector<1x8xf32>
    %11 = arith.mulf %6, %6 : vector<32x8xf32>
    %cst_7 = arith.constant dense<0.000000e+00> : vector<8xf32>
    %12 = vector.multi_reduction <add>, %11, %cst_7 [0] : vector<32x8xf32> to vector<8xf32>
    %13 = vector.shape_cast %12 : vector<8xf32> to vector<1x8xf32>
    %cst_8 = arith.constant 3.200000e+01 : f32
    %14 = vector.broadcast %cst_8 : f32 to vector<1x8xf32>
    %15 = arith.divf %13, %14 : vector<1x8xf32>
    %16 = arith.mulf %10, %10 : vector<1x8xf32>
    %17 = arith.subf %15, %16 : vector<1x8xf32>
    %cst_9 = arith.constant 0.000000e+00 : f32
    %18 = vector.broadcast %cst_9 : f32 to vector<1x8xf32>
    %19 = arith.maximumf %17, %18 : vector<1x8xf32>
    %20 = vector.broadcast %10 : vector<1x8xf32> to vector<32x8xf32>
    %21 = arith.subf %6, %20 : vector<32x8xf32>
    %cst_10 = arith.constant 9.99999974E-6 : f32
    %22 = vector.broadcast %cst_10 : f32 to vector<1x8xf32>
    %23 = arith.addf %19, %22 : vector<1x8xf32>
    %24 = math.rsqrt %23 : vector<1x8xf32>
    %25 = vector.broadcast %24 : vector<1x8xf32> to vector<32x8xf32>
    %26 = arith.mulf %21, %25 : vector<32x8xf32>
    %27 = vector.extract_strided_slice %2 {offsets = [0, 1], sizes = [32, 1], strides = [1, 1]} : vector<32x3xf32> to vector<32x1xf32>
    %28 = vector.broadcast %27 : vector<32x1xf32> to vector<32x8xf32>
    %29 = arith.mulf %26, %28 : vector<32x8xf32>
    %30 = vector.extract_strided_slice %2 {offsets = [0, 2], sizes = [32, 1], strides = [1, 1]} : vector<32x3xf32> to vector<32x1xf32>
    %31 = vector.broadcast %30 : vector<32x1xf32> to vector<32x8xf32>
    %32 = arith.addf %29, %31 : vector<32x8xf32>
    %cst_11 = arith.constant 0.000000e+00 : f32
    %33 = vector.broadcast %cst_11 : f32 to vector<32x8xf32>
    %34 = arith.maximumf %32, %33 : vector<32x8xf32>
    %c0_12 = arith.constant 0 : index
    %c0_13 = arith.constant 0 : index
    %35 = vector.load %arg4[%c0_12, %c0_13] : memref<32x32xf32, #tpu.memory_space<vmem>>, vector<32x32xf32>
    %c0_14 = arith.constant 0 : index
    %c0_15 = arith.constant 0 : index
    %36 = vector.load %arg5[%c0_14, %c0_15] : memref<32x3xf32, #tpu.memory_space<vmem>>, vector<32x3xf32>
    %cst_16 = arith.constant dense<0.000000e+00> : vector<32x8xf32>
    %37 = tpu.matmul %35, %34, %cst_16 {dimension_numbers = #tpu.dot_dimension_numbers<[1], [0], [0], [1], [0, 0, 1, 1], [], []>} : vector<32x32xf32>, vector<32x8xf32>, vector<32x8xf32> -> vector<32x8xf32>
    %38 = vector.extract_strided_slice %36 {offsets = [0, 0], sizes = [32, 1], strides = [1, 1]} : vector<32x3xf32> to vector<32x1xf32>
    %39 = vector.broadcast %38 : vector<32x1xf32> to vector<32x8xf32>
    %40 = arith.addf %37, %39 : vector<32x8xf32>
    %cst_17 = arith.constant dense<0.000000e+00> : vector<8xf32>
    %41 = vector.multi_reduction <add>, %40, %cst_17 [0] : vector<32x8xf32> to vector<8xf32>
    %42 = vector.shape_cast %41 : vector<8xf32> to vector<1x8xf32>
    %cst_18 = arith.constant 3.200000e+01 : f32
    %43 = vector.broadcast %cst_18 : f32 to vector<1x8xf32>
    %44 = arith.divf %42, %43 : vector<1x8xf32>
    %45 = arith.mulf %40, %40 : vector<32x8xf32>
    %cst_19 = arith.constant dense<0.000000e+00> : vector<8xf32>
    %46 = vector.multi_reduction <add>, %45, %cst_19 [0] : vector<32x8xf32> to vector<8xf32>
    %47 = vector.shape_cast %46 : vector<8xf32> to vector<1x8xf32>
    %cst_20 = arith.constant 3.200000e+01 : f32
    %48 = vector.broadcast %cst_20 : f32 to vector<1x8xf32>
    %49 = arith.divf %47, %48 : vector<1x8xf32>
    %50 = arith.mulf %44, %44 : vector<1x8xf32>
    %51 = arith.subf %49, %50 : vector<1x8xf32>
    %cst_21 = arith.constant 0.000000e+00 : f32
    %52 = vector.broadcast %cst_21 : f32 to vector<1x8xf32>
    %53 = arith.maximumf %51, %52 : vector<1x8xf32>
    %54 = vector.broadcast %44 : vector<1x8xf32> to vector<32x8xf32>
    %55 = arith.subf %40, %54 : vector<32x8xf32>
    %cst_22 = arith.constant 9.99999974E-6 : f32
    %56 = vector.broadcast %cst_22 : f32 to vector<1x8xf32>
    %57 = arith.addf %53, %56 : vector<1x8xf32>
    %58 = math.rsqrt %57 : vector<1x8xf32>
    %59 = vector.broadcast %58 : vector<1x8xf32> to vector<32x8xf32>
    %60 = arith.mulf %55, %59 : vector<32x8xf32>
    %61 = vector.extract_strided_slice %36 {offsets = [0, 1], sizes = [32, 1], strides = [1, 1]} : vector<32x3xf32> to vector<32x1xf32>
    %62 = vector.broadcast %61 : vector<32x1xf32> to vector<32x8xf32>
    %63 = arith.mulf %60, %62 : vector<32x8xf32>
    %64 = vector.extract_strided_slice %36 {offsets = [0, 2], sizes = [32, 1], strides = [1, 1]} : vector<32x3xf32> to vector<32x1xf32>
    %65 = vector.broadcast %64 : vector<32x1xf32> to vector<32x8xf32>
    %66 = arith.addf %63, %65 : vector<32x8xf32>
    %cst_23 = arith.constant 0.000000e+00 : f32
    %67 = vector.broadcast %cst_23 : f32 to vector<32x8xf32>
    %68 = arith.maximumf %66, %67 : vector<32x8xf32>
    %c0_24 = arith.constant 0 : index
    %c0_25 = arith.constant 0 : index
    %69 = vector.load %arg6[%c0_24, %c0_25] : memref<4x32xf32, #tpu.memory_space<vmem>>, vector<4x32xf32>
    %c0_26 = arith.constant 0 : index
    %c0_27 = arith.constant 0 : index
    %70 = vector.load %arg7[%c0_26, %c0_27] : memref<4x2xf32, #tpu.memory_space<vmem>>, vector<4x2xf32>
    %cst_28 = arith.constant dense<0.000000e+00> : vector<4x8xf32>
    %71 = tpu.matmul %69, %68, %cst_28 {dimension_numbers = #tpu.dot_dimension_numbers<[1], [0], [0], [1], [0, 0, 1, 1], [], []>} : vector<4x32xf32>, vector<32x8xf32>, vector<4x8xf32> -> vector<4x8xf32>
    %72 = vector.extract_strided_slice %70 {offsets = [0, 0], sizes = [4, 1], strides = [1, 1]} : vector<4x2xf32> to vector<4x1xf32>
    %73 = vector.broadcast %72 : vector<4x1xf32> to vector<4x8xf32>
    %74 = arith.addf %71, %73 : vector<4x8xf32>
    %75 = math.tanh %74 : vector<4x8xf32>
    %76 = vector.extract_strided_slice %70 {offsets = [0, 1], sizes = [4, 1], strides = [1, 1]} : vector<4x2xf32> to vector<4x1xf32>
    %77 = vector.broadcast %76 : vector<4x1xf32> to vector<4x8xf32>
    %78 = arith.mulf %75, %77 : vector<4x8xf32>
    %c0_29 = arith.constant 0 : index
    %c0_30 = arith.constant 0 : index
    %79 = vector.load %arg8[%c0_29, %c0_30] : memref<4x8xf32, #tpu.memory_space<vmem>>, vector<4x8xf32>
    tpu.vector_store %arg8[%c0_29, %c0_30], %78 {strides = array<i32>} : memref<4x8xf32, #tpu.memory_space<vmem>>, vector<4x8xf32>,
    return
  }
  func.func @transform_0(%arg0: i32) -> (i32, i32) {
    %c0_i32 = arith.constant 0 : i32
    %c0_i32_0 = arith.constant 0 : i32
    return %c0_i32, %arg0 : i32, i32
  }
  func.func @transform_1(%arg0: i32) -> (i32, i32) {
    %c0_i32 = arith.constant 0 : i32
    %c0_i32_0 = arith.constant 0 : i32
    %c0_i32_1 = arith.constant 0 : i32
    return %c0_i32, %c0_i32_0 : i32, i32
  }
  func.func @transform_2(%arg0: i32) -> (i32, i32) {
    %c0_i32 = arith.constant 0 : i32
    %c0_i32_0 = arith.constant 0 : i32
    %c0_i32_1 = arith.constant 0 : i32
    return %c0_i32, %c0_i32_0 : i32, i32
  }
  func.func @transform_3(%arg0: i32) -> (i32, i32) {
    %c0_i32 = arith.constant 0 : i32
    %c0_i32_0 = arith.constant 0 : i32
    %c0_i32_1 = arith.constant 0 : i32
    return %c0_i32, %c0_i32_0 : i32, i32
  }
  func.func @transform_4(%arg0: i32) -> (i32, i32) {
    %c0_i32 = arith.constant 0 : i32
    %c0_i32_0 = arith.constant 0 : i32
    %c0_i32_1 = arith.constant 0 : i32
    return %c0_i32, %c0_i32_0 : i32, i32
  }
  func.func @transform_5(%arg0: i32) -> (i32, i32) {
    %c0_i32 = arith.constant 0 : i32
    %c0_i32_0 = arith.constant 0 : i32
    %c0_i32_1 = arith.constant 0 : i32
    return %c0_i32, %c0_i32_0 : i32, i32
  }
  func.func @transform_6(%arg0: i32) -> (i32, i32) {
    %c0_i32 = arith.constant 0 : i32
    %c0_i32_0 = arith.constant 0 : i32
    %c0_i32_1 = arith.constant 0 : i32
    return %c0_i32, %c0_i32_0 : i32, i32
  }
  func.func @transform_7(%arg0: i32) -> (i32, i32) {
    %c0_i32 = arith.constant 0 : i32
    %c0_i32_0 = arith.constant 0 : i32
    return %c0_i32, %arg0 : i32, i32
  }
}

</mosaic_0001>

<llo_original>
// kernel: fcdp_forward.1
$region0: #{fcdp_forward.1}
  #allocation0 [shape = 'u32[]', space=smem, size = 0x4, offset = 0x4, fixed_abs, tag = 'smem constant byte address 0x4 - core index']
  #allocation1 [shape = 'u32[144,128]{1,0:T(1,128)}', space=vmem, size = 0x12000, scoped, tag = 'internal scratch']
  %s0 = inlined_call_operand.vmem [shape: f32[16,8], index: 0, kind: input, shape index: {}]
  %s1 = inlined_call_operand.vmem [shape: f32[32,16], index: 1, kind: input, shape index: {}]
  %s2 = inlined_call_operand.vmem [shape: f32[32,3], index: 2, kind: input, shape index: {}]
  %s3 = inlined_call_operand.vmem [shape: f32[32,32], index: 3, kind: input, shape index: {}]
  %s4 = inlined_call_operand.vmem [shape: f32[32,3], index: 4, kind: input, shape index: {}]
  %s5 = inlined_call_operand.vmem [shape: f32[4,32], index: 5, kind: input, shape index: {}]
  %s6 = inlined_call_operand.vmem [shape: f32[4,2], index: 6, kind: input, shape index: {}]
  %s7 = inlined_call_operand.hbm [shape: f32[4,8], index: 7, kind: output, shape index: {}]
  %s8 = sld [smem:[#allocation0]]
  $region38: #{fcdp_forward.1} parent=0
    _
  %s10 = ssub.s32 1, %s8
  %s11 = scalar_select 0, %s10, %s8
  $region1: #{fcdp_forward.1} parent=0
    #allocation2 [shape = 'u8[2048]{0}', space=vmem, size = 0x800, scoped, tag = 'output window, operand 0, single buffered']
    #allocation3 [shape = 's32[1]{0}', space=sflag, size = 0x4, scoped, tag = 'scoped memory for fcdp_forward.1']
    %12 = vsyncpa [#allocation3], 0
    // Predicated region
    $region2: #{fcdp_forward.1} parent=1 // pred_check
      _
    $region3: #{fcdp_forward.1} parent=1 // pred_check_branch
      %14 = sbr.rel (0) target = $region5
    $region4: #{fcdp_forward.1} parent=1 // pred_region
      _
    $region5: #{fcdp_forward.1} parent=1 // pred_fallthru
      _
    // Predicated region
    $region6: #{fcdp_forward.1} parent=1 // pred_check
      _
    $region7: #{fcdp_forward.1} parent=1 // pred_check_branch
      %16 = sbr.rel (0) target = $region9
    $region8: #{fcdp_forward.1} parent=1 // pred_region
      _
    $region9: #{fcdp_forward.1} parent=1 // pred_fallthru
      _
    // Predicated region
    $region10: #{fcdp_forward.1} parent=1 // pred_check
      _
    $region11: #{fcdp_forward.1} parent=1 // pred_check_branch
      %18 = sbr.rel (0) target = $region13
    $region12: #{fcdp_forward.1} parent=1 // pred_region
      _
    $region13: #{fcdp_forward.1} parent=1 // pred_fallthru
      _
    // Predicated region
    $region14: #{fcdp_forward.1} parent=1 // pred_check
      _
    $region15: #{fcdp_forward.1} parent=1 // pred_check_branch
      %20 = sbr.rel (0) target = $region17
    $region16: #{fcdp_forward.1} parent=1 // pred_region
      _
    $region17: #{fcdp_forward.1} parent=1 // pred_fallthru
      _
    // Predicated region
    $region18: #{fcdp_forward.1} parent=1 // pred_check
      _
    $region19: #{fcdp_forward.1} parent=1 // pred_check_branch
      %22 = sbr.rel (0) target = $region21
    $region20: #{fcdp_forward.1} parent=1 // pred_region
      _
    $region21: #{fcdp_forward.1} parent=1 // pred_fallthru
      _
    // Predicated region
    $region22: #{fcdp_forward.1} parent=1 // pred_check
      _
    $region23: #{fcdp_forward.1} parent=1 // pred_check_branch
      %24 = sbr.rel (0) target = $region25
    $region24: #{fcdp_forward.1} parent=1 // pred_region
      _
    $region25: #{fcdp_forward.1} parent=1 // pred_fallthru
      _
    // Predicated region
    $region26: #{fcdp_forward.1} parent=1 // pred_check
      _
    $region27: #{fcdp_forward.1} parent=1 // pred_check_branch
      %26 = sbr.rel (0) target = $region29
    $region28: #{fcdp_forward.1} parent=1 // pred_region
      _
    $region29: #{fcdp_forward.1} parent=1 // pred_fallthru
      _
    %v27 = vld [vmem:[%s0] sm:$0xff]
    %v28 = vld [vmem:[%s0 + $0x8] sm:$0xff]
    %v29 = vld [vmem:[%s1] sm:$0xff]
    %v30 = vld [vmem:[%s1 + $0x8] sm:$0xff]
    %v31 = vld [vmem:[%s1 + $0x10] sm:$0xff]
    %v32 = vld [vmem:[%s1 + $0x18] sm:$0xff]
    %v33 = vld [vmem:[%s2] sm:$0xff]
    %v34 = vld [vmem:[%s2 + $0x8] sm:$0xff]
    %v35 = vld [vmem:[%s2 + $0x10] sm:$0xff]
    %v36 = vld [vmem:[%s2 + $0x18] sm:$0xff]
    %38 = vset.pattern.permute.xlu0 0
    %39 = vperm.xlu0 %38, %v33
    %v40 = vpop.permute.xlu0 %39
    %43 = vset.pattern.permute.xlu0 0
    %44 = vperm.xlu0 %43, %v34
    %v45 = vpop.permute.xlu0 %44
    %48 = vset.pattern.permute.xlu0 0
    %49 = vperm.xlu0 %48, %v35
    %v50 = vpop.permute.xlu0 %49
    %53 = vset.pattern.permute.xlu0 0
    %54 = vperm.xlu0 %53, %v36
    %v55 = vpop.permute.xlu0 %54
    %vm57 = vcmask 130048
    %v59 = vsel %vm57, %v29, 0
    %v62 = vsel %vm57, %v30, 0
    %v65 = vsel %vm57, %v31, 0
    %v68 = vsel %vm57, %v32, 0
    %70 = vmatprep.subr.mxu0 0.0
    %71 = vmatpush1.msra.mxu0 0.0
    %72 = vmatprep.subr.mxu0 0.0
    %73 = vmatpush1.msra.mxu0 0.0
    %74 = vmatprep.subr.mxu0 0.0
    %75 = vmatpush1.msra.mxu0 0.0
    %76 = vmatprep.subr.mxu0 0.0
    %77 = vmatpush1.msra.mxu0 0.0
    %78 = vmatprep.subr.mxu0 0.0
    %79 = vmatpush1.msra.mxu0 0.0
    %80 = vmatprep.subr.mxu0 0.0
    %81 = vmatpush1.msra.mxu0 0.0
    %82 = vmatprep.subr.mxu0 0.0
    %83 = vmatpush1.msra.mxu0 0.0
    %84 = vmatprep.subr.mxu0 0.0
    %85 = vmatpush1.msra.mxu0 0.0
    %86 = vmatprep.subr.mxu0 0.0
    %87 = vmatpush1.msra.mxu0 0.0
    %88 = vmatprep.subr.mxu0 0.0
    %89 = vmatpush1.msra.mxu0 0.0
    %90 = vmatprep.subr.mxu0 0.0
    %91 = vmatpush1.msra.mxu0 0.0
    %92 = vmatprep.subr.mxu0 0.0
    %93 = vmatpush1.msra.mxu0 0.0
    %94 = vmatprep.subr.mxu0 0.0
    %95 = vmatpush1.msra.mxu0 0.0
    %96 = vmatprep.subr.mxu0 0.0
    %97 = vmatpush1.msra.mxu0 0.0
    %98 = vmatprep.subr.mxu0 0.0
    %99 = vmatpush1.msra.mxu0 %v28
    %100 = vmatprep.subr.mxu0 0.0
    %101 = vmatpush1.msra.mxu0 %v27
    %102 = vmatprep.subr.mxu0 0.0
    %103 = vmatpush2.msra.mxu0 0.0
    %104 = vmatprep.subr.mxu0 0.0
    %105 = vmatpush2.msra.mxu0 0.0
    %106 = vmatprep.subr.mxu0 0.0
    %107 = vmatpush2.msra.mxu0 0.0
    %108 = vmatprep.subr.mxu0 0.0
    %109 = vmatpush2.msra.mxu0 0.0
    %110 = vmatprep.subr.mxu0 0.0
    %111 = vmatpush2.msra.mxu0 0.0
    %112 = vmatprep.subr.mxu0 0.0
    %113 = vmatpush2.msra.mxu0 0.0
    %114 = vmatprep.subr.mxu0 0.0
    %115 = vmatpush2.msra.mxu0 0.0
    %116 = vmatprep.subr.mxu0 0.0
    %117 = vmatpush2.msra.mxu0 0.0
    %118 = vmatprep.subr.mxu0 0.0
    %119 = vmatpush2.msra.mxu0 0.0
    %120 = vmatprep.subr.mxu0 0.0
    %121 = vmatpush2.msra.mxu0 0.0
    %122 = vmatprep.subr.mxu0 0.0
    %123 = vmatpush2.msra.mxu0 0.0
    %124 = vmatprep.subr.mxu0 0.0
    %125 = vmatpush2.msra.mxu0 0.0
    %126 = vmatprep.subr.mxu0 0.0
    %127 = vmatpush2.msra.mxu0 0.0
    %128 = vmatprep.subr.mxu0 0.0
    %129 = vmatpush2.msra.mxu0 0.0
    %130 = vmatprep.subr.mxu0 0.0
    %131 = vmatpush2.msra.mxu0 0.0
    %132 = vmatprep.subr.mxu0 0.0
    %133 = vmatpush2.msra.mxu0 0.0
    %134 = vmatprep.mubr.f32.mxu0 0.0
    %135 = vmatmul.mubr.f32.gmra.mxu0 %v59
    %v136 = vpop.f32.mrf.mxu0
    %v137 = vadd.f32 %v40, %v136
    %v138 = vpop.f32.mrf.mxu0
    %139 = vmatprep.mubr.f32.mxu0 0.0
    %140 = vmatmul.mubr.f32.gmra.mxu0 %v62
    %v141 = vpop.f32.mrf.mxu0
    %v142 = vadd.f32 %v45, %v141
    %v143 = vpop.f32.mrf.mxu0
    %144 = vmatprep.mubr.f32.mxu0 0.0
    %145 = vmatmul.mubr.f32.gmra.mxu0 %v65
    %v146 = vpop.f32.mrf.mxu0
    %v147 = vadd.f32 %v50, %v146
    %v148 = vpop.f32.mrf.mxu0
    %149 = vmatprep.mubr.f32.mxu0 0.0
    %150 = vmatmul.mubr.f32.gmra.mxu0 %v68
    %v151 = vpop.f32.mrf.mxu0
    %v152 = vadd.f32 %v55, %v151
    %v153 = vpop.f32.mrf.mxu0
    %154 = vdwg.mxu0
    %vm155 = vcmask 64512
    %v156 = vsel %vm155, %v137, 0.0
    %v157 = vsel %vm155, %v142, 0.0
    %v158 = vadd.f32 %v156, %v157
    %v159 = vsel %vm155, %v147, 0.0
    %v160 = vadd.f32 %v158, %v159
    %v161 = vsel %vm155, %v152, 0.0
    %v162 = vadd.f32 %v160, %v161
    %v163 = vrot.slane %v162, 4
    %v164 = vadd.f32 %v162, %v163
    %v165 = vrot.slane %v164, 2
    %v166 = vadd.f32 %v164, %v165
    %v167 = vrot.slane %v166, 1
    %v168 = vadd.f32 %v166, %v167
    %v169 = vrcp.pop 32.0
    %v170 = vmul.f32 %v168, %v169
    %v171 = vmul.f32 %v137, %v137
    %v172 = vmul.f32 %v142, %v142
    %v173 = vmul.f32 %v147, %v147
    %v174 = vmul.f32 %v152, %v152
    %v175 = vsel %vm155, %v171, 0.0
    %v176 = vsel %vm155, %v172, 0.0
    %v177 = vadd.f32 %v175, %v176
    %v178 = vsel %vm155, %v173, 0.0
    %v179 = vadd.f32 %v177, %v178
    %v180 = vsel %vm155, %v174, 0.0
    %v181 = vadd.f32 %v179, %v180
    %v182 = vrot.slane %v181, 4
    %v183 = vadd.f32 %v181, %v182
    %v184 = vrot.slane %v183, 2
    %v185 = vadd.f32 %v183, %v184
    %v186 = vrot.slane %v185, 1
    %v187 = vadd.f32 %v185, %v186
    %v188 = vmul.f32 %v187, %v169
    %v189 = vmul.f32 %v170, %v170
    %v190 = vsub.f32 %v188, %v189
    %v191 = vmax.f32 %v190, 0.0
    %v192 = vsub.f32 %v137, %v170
    %v193 = vsub.f32 %v142, %v170
    %v194 = vsub.f32 %v147, %v170
    %v195 = vsub.f32 %v152, %v170
    %v196 = vadd.f32 %v191, 1e-05
    %v197 = vrsqrt.pop %v196
    %v198 = vmul.f32 %v192, %v197
    %v199 = vmul.f32 %v193, %v197
    %v200 = vmul.f32 %v194, %v197
    %v201 = vmul.f32 %v195, %v197
    %202 = vset.pattern.permute.xlu0 1
    %203 = vperm.xlu0 %202, %v33
    %v204 = vpop.permute.xlu0 %203
    %206 = vset.pattern.permute.xlu0 1
    %207 = vperm.xlu0 %206, %v34
    %v208 = vpop.permute.xlu0 %207
    %210 = vset.pattern.permute.xlu0 1
    %211 = vperm.xlu0 %210, %v35
    %v212 = vpop.permute.xlu0 %211
    %214 = vset.pattern.permute.xlu0 1
    %215 = vperm.xlu0 %214, %v36
    %v216 = vpop.permute.xlu0 %215
    %v218 = vmul.f32 %v198, %v204
    %v219 = vmul.f32 %v199, %v208
    %v220 = vmul.f32 %v200, %v212
    %v221 = vmul.f32 %v201, %v216
    %222 = vset.pattern.permute.xlu0 2
    %223 = vperm.xlu0 %222, %v33
    %v224 = vpop.permute.xlu0 %223
    %226 = vset.pattern.permute.xlu0 2
    %227 = vperm.xlu0 %226, %v34
    %v228 = vpop.permute.xlu0 %227
    %230 = vset.pattern.permute.xlu0 2
    %231 = vperm.xlu0 %230, %v35
    %v232 = vpop.permute.xlu0 %231
    %234 = vset.pattern.permute.xlu0 2
    %235 = vperm.xlu0 %234, %v36
    %v236 = vpop.permute.xlu0 %235
    %v238 = vadd.f32 %v218, %v224
    %v239 = vadd.f32 %v219, %v228
    %v240 = vadd.f32 %v220, %v232
    %v241 = vadd.f32 %v221, %v236
    %v242 = vmax.f32 %v238, 0.0
    %v243 = vmax.f32 %v239, 0.0
    %v244 = vmax.f32 %v240, 0.0
    %v245 = vmax.f32 %v241, 0.0
    %v246 = vld [vmem:[%s3] sm:$0xff]
    %v247 = vld [vmem:[%s3 + $0x8] sm:$0xff]
    %v248 = vld [vmem:[%s3 + $0x10] sm:$0xff]
    %v249 = vld [vmem:[%s3 + $0x18] sm:$0xff]
    %v250 = vld [vmem:[%s4] sm:$0xff]
    %v251 = vld [vmem:[%s4 + $0x8] sm:$0xff]
    %v252 = vld [vmem:[%s4 + $0x10] sm:$0xff]
    %v253 = vld [vmem:[%s4 + $0x18] sm:$0xff]
    %255 = vset.pattern.permute.xlu0 0
    %256 = vperm.xlu0 %255, %v250
    %v257 = vpop.permute.xlu0 %256
    %260 = vset.pattern.permute.xlu0 0
    %261 = vperm.xlu0 %260, %v251
    %v262 = vpop.permute.xlu0 %261
    %265 = vset.pattern.permute.xlu0 0
    %266 = vperm.xlu0 %265, %v252
    %v267 = vpop.permute.xlu0 %266
    %270 = vset.pattern.permute.xlu0 0
    %271 = vperm.xlu0 %270, %v253
    %v272 = vpop.permute.xlu0 %271
    %vm274 = vcmask 261120
    %v276 = vsel %vm274, %v246, 0
    %v279 = vsel %vm274, %v247, 0
    %v282 = vsel %vm274, %v248, 0
    %v285 = vsel %vm274, %v249, 0
    %287 = vmatprep.subr.mxu0 0.0
    %288 = vmatpush1.msra.mxu0 0.0
    %289 = vmatprep.subr.mxu0 0.0
    %290 = vmatpush1.msra.mxu0 0.0
    %291 = vmatprep.subr.mxu0 0.0
    %292 = vmatpush1.msra.mxu0 0.0
    %293 = vmatprep.subr.mxu0 0.0
    %294 = vmatpush1.msra.mxu0 0.0
    %295 = vmatprep.subr.mxu0 0.0
    %296 = vmatpush1.msra.mxu0 0.0
    %297 = vmatprep.subr.mxu0 0.0
    %298 = vmatpush1.msra.mxu0 0.0
    %299 = vmatprep.subr.mxu0 0.0
    %300 = vmatpush1.msra.mxu0 0.0
    %301 = vmatprep.subr.mxu0 0.0
    %302 = vmatpush1.msra.mxu0 0.0
    %303 = vmatprep.subr.mxu0 0.0
    %304 = vmatpush1.msra.mxu0 0.0
    %305 = vmatprep.subr.mxu0 0.0
    %306 = vmatpush1.msra.mxu0 0.0
    %307 = vmatprep.subr.mxu0 0.0
    %308 = vmatpush1.msra.mxu0 0.0
    %309 = vmatprep.subr.mxu0 0.0
    %310 = vmatpush1.msra.mxu0 0.0
    %311 = vmatprep.subr.mxu0 0.0
    %312 = vmatpush1.msra.mxu0 %v245
    %313 = vmatprep.subr.mxu0 0.0
    %314 = vmatpush1.msra.mxu0 %v244
    %315 = vmatprep.subr.mxu0 0.0
    %316 = vmatpush1.msra.mxu0 %v243
    %317 = vmatprep.subr.mxu0 0.0
    %318 = vmatpush1.msra.mxu0 %v242
    %319 = vmatprep.subr.mxu0 0.0
    %320 = vmatpush2.msra.mxu0 0.0
    %321 = vmatprep.subr.mxu0 0.0
    %322 = vmatpush2.msra.mxu0 0.0
    %323 = vmatprep.subr.mxu0 0.0
    %324 = vmatpush2.msra.mxu0 0.0
    %325 = vmatprep.subr.mxu0 0.0
    %326 = vmatpush2.msra.mxu0 0.0
    %327 = vmatprep.subr.mxu0 0.0
    %328 = vmatpush2.msra.mxu0 0.0
    %329 = vmatprep.subr.mxu0 0.0
    %330 = vmatpush2.msra.mxu0 0.0
    %331 = vmatprep.subr.mxu0 0.0
    %332 = vmatpush2.msra.mxu0 0.0
    %333 = vmatprep.subr.mxu0 0.0
    %334 = vmatpush2.msra.mxu0 0.0
    %335 = vmatprep.subr.mxu0 0.0
    %336 = vmatpush2.msra.mxu0 0.0
    %337 = vmatprep.subr.mxu0 0.0
    %338 = vmatpush2.msra.mxu0 0.0
    %339 = vmatprep.subr.mxu0 0.0
    %340 = vmatpush2.msra.mxu0 0.0
    %341 = vmatprep.subr.mxu0 0.0
    %342 = vmatpush2.msra.mxu0 0.0
    %343 = vmatprep.subr.mxu0 0.0
    %344 = vmatpush2.msra.mxu0 0.0
    %345 = vmatprep.subr.mxu0 0.0
    %346 = vmatpush2.msra.mxu0 0.0
    %347 = vmatprep.subr.mxu0 0.0
    %348 = vmatpush2.msra.mxu0 0.0
    %349 = vmatprep.subr.mxu0 0.0
    %350 = vmatpush2.msra.mxu0 0.0
    %351 = vmatprep.mubr.f32.mxu0 0.0
    %352 = vmatmul.mubr.f32.gmra.mxu0 %v276
    %v353 = vpop.f32.mrf.mxu0
    %v354 = vadd.f32 %v257, %v353
    %v355 = vpop.f32.mrf.mxu0
    %356 = vmatprep.mubr.f32.mxu0 0.0
    %357 = vmatmul.mubr.f32.gmra.mxu0 %v279
    %v358 = vpop.f32.mrf.mxu0
    %v359 = vadd.f32 %v262, %v358
    %v360 = vpop.f32.mrf.mxu0
    %361 = vmatprep.mubr.f32.mxu0 0.0
    %362 = vmatmul.mubr.f32.gmra.mxu0 %v282
    %v363 = vpop.f32.mrf.mxu0
    %v364 = vadd.f32 %v267, %v363
    %v365 = vpop.f32.mrf.mxu0
    %366 = vmatprep.mubr.f32.mxu0 0.0
    %367 = vmatmul.mubr.f32.gmra.mxu0 %v285
    %v368 = vpop.f32.mrf.mxu0
    %v369 = vadd.f32 %v272, %v368
    %v370 = vpop.f32.mrf.mxu0
    %371 = vdwg.mxu0
    %v372 = vsel %vm155, %v354, 0.0
    %v373 = vsel %vm155, %v359, 0.0
    %v374 = vadd.f32 %v372, %v373
    %v375 = vsel %vm155, %v364, 0.0
    %v376 = vadd.f32 %v374, %v375
    %v377 = vsel %vm155, %v369, 0.0
    %v378 = vadd.f32 %v376, %v377
    %v379 = vrot.slane %v378, 4
    %v380 = vadd.f32 %v378, %v379
    %v381 = vrot.slane %v380, 2
    %v382 = vadd.f32 %v380, %v381
    %v383 = vrot.slane %v382, 1
    %v384 = vadd.f32 %v382, %v383
    %v385 = vmul.f32 %v384, %v169
    %v386 = vmul.f32 %v354, %v354
    %v387 = vmul.f32 %v359, %v359
    %v388 = vmul.f32 %v364, %v364
    %v389 = vmul.f32 %v369, %v369
    %v390 = vsel %vm155, %v386, 0.0
    %v391 = vsel %vm155, %v387, 0.0
    %v392 = vadd.f32 %v390, %v391
    %v393 = vsel %vm155, %v388, 0.0
    %v394 = vadd.f32 %v392, %v393
    %v395 = vsel %vm155, %v389, 0.0
    %v396 = vadd.f32 %v394, %v395
    %v397 = vrot.slane %v396, 4
    %v398 = vadd.f32 %v396, %v397
    %v399 = vrot.slane %v398, 2
    %v400 = vadd.f32 %v398, %v399
    %v401 = vrot.slane %v400, 1
    %v402 = vadd.f32 %v400, %v401
    %v403 = vmul.f32 %v402, %v169
    %v404 = vmul.f32 %v385, %v385
    %v405 = vsub.f32 %v403, %v404
    %v406 = vmax.f32 %v405, 0.0
    %v407 = vsub.f32 %v354, %v385
    %v408 = vsub.f32 %v359, %v385
    %v409 = vsub.f32 %v364, %v385
    %v410 = vsub.f32 %v369, %v385
    %v411 = vadd.f32 %v406, 1e-05
    %v412 = vrsqrt.pop %v411
    %v413 = vmul.f32 %v407, %v412
    %v414 = vmul.f32 %v408, %v412
    %v415 = vmul.f32 %v409, %v412
    %v416 = vmul.f32 %v410, %v412
    %417 = vset.pattern.permute.xlu0 1
    %418 = vperm.xlu0 %417, %v250
    %v419 = vpop.permute.xlu0 %418
    %421 = vset.pattern.permute.xlu0 1
    %422 = vperm.xlu0 %421, %v251
    %v423 = vpop.permute.xlu0 %422
    %425 = vset.pattern.permute.xlu0 1
    %426 = vperm.xlu0 %425, %v252
    %v427 = vpop.permute.xlu0 %426
    %429 = vset.pattern.permute.xlu0 1
    %430 = vperm.xlu0 %429, %v253
    %v431 = vpop.permute.xlu0 %430
    %v433 = vmul.f32 %v413, %v419
    %v434 = vmul.f32 %v414, %v423
    %v435 = vmul.f32 %v415, %v427
    %v436 = vmul.f32 %v416, %v431
    %437 = vset.pattern.permute.xlu0 2
    %438 = vperm.xlu0 %437, %v250
    %v439 = vpop.permute.xlu0 %438
    %441 = vset.pattern.permute.xlu0 2
    %442 = vperm.xlu0 %441, %v251
    %v443 = vpop.permute.xlu0 %442
    %445 = vset.pattern.permute.xlu0 2
    %446 = vperm.xlu0 %445, %v252
    %v447 = vpop.permute.xlu0 %446
    %449 = vset.pattern.permute.xlu0 2
    %450 = vperm.xlu0 %449, %v253
    %v451 = vpop.permute.xlu0 %450
    %v453 = vadd.f32 %v433, %v439
    %v454 = vadd.f32 %v434, %v443
    %v455 = vadd.f32 %v435, %v447
    %v456 = vadd.f32 %v436, %v451
    %v457 = vmax.f32 %v453, 0.0
    %v458 = vmax.f32 %v454, 0.0
    %v459 = vmax.f32 %v455, 0.0
    %v460 = vmax.f32 %v456, 0.0
    %v461 = vld [vmem:[%s5] sm:$0xf]
    %v462 = vld [vmem:[%s6] sm:$0xf]
    %464 = vset.pattern.permute.xlu0 0
    %465 = vperm.xlu0 %464, %v462
    %v466 = vpop.permute.xlu0 %465
    %v469 = vsel %vm274, %v461, 0
    %471 = vmatprep.subr.mxu0 0.0
    %472 = vmatpush1.msra.mxu0 0.0
    %473 = vmatprep.subr.mxu0 0.0
    %474 = vmatpush1.msra.mxu0 0.0
    %475 = vmatprep.subr.mxu0 0.0
    %476 = vmatpush1.msra.mxu0 0.0
    %477 = vmatprep.subr.mxu0 0.0
    %478 = vmatpush1.msra.mxu0 0.0
    %479 = vmatprep.subr.mxu0 0.0
    %480 = vmatpush1.msra.mxu0 0.0
    %481 = vmatprep.subr.mxu0 0.0
    %482 = vmatpush1.msra.mxu0 0.0
    %483 = vmatprep.subr.mxu0 0.0
    %484 = vmatpush1.msra.mxu0 0.0
    %485 = vmatprep.subr.mxu0 0.0
    %486 = vmatpush1.msra.mxu0 0.0
    %487 = vmatprep.subr.mxu0 0.0
    %488 = vmatpush1.msra.mxu0 0.0
    %489 = vmatprep.subr.mxu0 0.0
    %490 = vmatpush1.msra.mxu0 0.0
    %491 = vmatprep.subr.mxu0 0.0
    %492 = vmatpush1.msra.mxu0 0.0
    %493 = vmatprep.subr.mxu0 0.0
    %494 = vmatpush1.msra.mxu0 0.0
    %495 = vmatprep.subr.mxu0 0.0
    %496 = vmatpush1.msra.mxu0 %v460
    %497 = vmatprep.subr.mxu0 0.0
    %498 = vmatpush1.msra.mxu0 %v459
    %499 = vmatprep.subr.mxu0 0.0
    %500 = vmatpush1.msra.mxu0 %v458
    %501 = vmatprep.subr.mxu0 0.0
    %502 = vmatpush1.msra.mxu0 %v457
    %503 = vmatprep.subr.mxu0 0.0
    %504 = vmatpush2.msra.mxu0 0.0
    %505 = vmatprep.subr.mxu0 0.0
    %506 = vmatpush2.msra.mxu0 0.0
    %507 = vmatprep.subr.mxu0 0.0
    %508 = vmatpush2.msra.mxu0 0.0
    %509 = vmatprep.subr.mxu0 0.0
    %510 = vmatpush2.msra.mxu0 0.0
    %511 = vmatprep.subr.mxu0 0.0
    %512 = vmatpush2.msra.mxu0 0.0
    %513 = vmatprep.subr.mxu0 0.0
    %514 = vmatpush2.msra.mxu0 0.0
    %515 = vmatprep.subr.mxu0 0.0
    %516 = vmatpush2.msra.mxu0 0.0
    %517 = vmatprep.subr.mxu0 0.0
    %518 = vmatpush2.msra.mxu0 0.0
    %519 = vmatprep.subr.mxu0 0.0
    %520 = vmatpush2.msra.mxu0 0.0
    %521 = vmatprep.subr.mxu0 0.0
    %522 = vmatpush2.msra.mxu0 0.0
    %523 = vmatprep.subr.mxu0 0.0
    %524 = vmatpush2.msra.mxu0 0.0
    %525 = vmatprep.subr.mxu0 0.0
    %526 = vmatpush2.msra.mxu0 0.0
    %527 = vmatprep.subr.mxu0 0.0
    %528 = vmatpush2.msra.mxu0 0.0
    %529 = vmatprep.subr.mxu0 0.0
    %530 = vmatpush2.msra.mxu0 0.0
    %531 = vmatprep.subr.mxu0 0.0
    %532 = vmatpush2.msra.mxu0 0.0
    %533 = vmatprep.subr.mxu0 0.0
    %534 = vmatpush2.msra.mxu0 0.0
    %535 = vmatprep.mubr.f32.mxu0 0.0
    %536 = vmatmul.mubr.f32.gmra.mxu0 %v469
    %v537 = vpop.f32.mrf.mxu0
    %v538 = vadd.f32 %v466, %v537
    %v539 = vpop.f32.mrf.mxu0
    %540 = vdwg.mxu0
    %v541 = vtanh.pop %v538
    %542 = vset.pattern.permute.xlu0 1
    %543 = vperm.xlu0 %542, %v462
    %v544 = vpop.permute.xlu0 %543
    %v546 = vmul.f32 %v541, %v544
    %vm547 = vcmask 60416
    %548 = vst.msk [vmem:[#allocation2] sm:$0xf] %vm547, %v546
    // Predicated region
    $region30: #{fcdp_forward.1} parent=1 // pred_check
      _
    $region31: #{fcdp_forward.1} parent=1 // pred_check_branch
      %550 = sbr.rel (0) target = $region33
    $region32: #{fcdp_forward.1} parent=1 // pred_region
      %s552 = ssub.s32 64, 64
      %553 = vsyncadd [#allocation3], %s552
      %s555 = sshll.u32 [#allocation2], 4
      %s556 = int_to_ptr.vmem [resolvable:$true] %s555
      %558 = dma.vmem_to_hbm [thread:$0]  %s556, 64, %s7, [#allocation3]
    $region33: #{fcdp_forward.1} parent=1 // pred_fallthru
      _
    // Predicated region
    $region34: #{fcdp_forward.1} parent=1 // pred_check
      _
    $region35: #{fcdp_forward.1} parent=1 // pred_check_branch
      %560 = sbr.rel (0) target = $region37
    $region36: #{fcdp_forward.1} parent=1 // pred_region
      %561 = dma.done [#allocation3], 64
    $region37: #{fcdp_forward.1} parent=1 // pred_fallthru
      _
    %562 = vsyncpa [#allocation3], 1

</llo_original>
